<compile_context>
chip_gen: v5e
topology: v5e:2x2
jax: 0.10.0
libtpu: 0.0.40
codegen_flags: <defaults>
</compile_context>

<pallas_src>
import jax
import jax.numpy as jnp
from jax import lax
from jax.experimental import pallas as pl
from jax.experimental.pallas import tpu as pltpu


def lstm_tagger_kernel(sent_ref, emb_ref, wih_t_ref, whh_t_ref, b_ref,
                       wtag_t_ref, btag_ref, out_ref):
    S = out_ref.shape[0]
    H = whh_t_ref.shape[0]

    # ---- Embedding gather (ids read from SMEM, rows from the VMEM table) ----
    embeds = jnp.concatenate(
        [emb_ref[pl.ds(sent_ref[t], 1), :] for t in range(S)], axis=0)  # (S,E)

    # ---- Input projection for every timestep in one MXU matmul: (S, 4H) ----
    xg = (jnp.dot(embeds, wih_t_ref[...], preferred_element_type=jnp.float32)
          + b_ref[...])

    whh_t = whh_t_ref[...]                       # hoist: load recurrent W once

    # ---- Unrolled LSTM recurrence; h/c/lstm_out stay in vregs ----
    # h0, c0 default to zeros (PyTorch default when no hidden is passed).
    h = jnp.zeros((1, H), jnp.float32)
    c = jnp.zeros((1, H), jnp.float32)
    hs = []
    for t in range(S):
        gates = xg[t:t + 1, :] + jnp.dot(
            h, whh_t, preferred_element_type=jnp.float32)      # (1, 4H)
        # Single full-vreg sigmoid; gate order i, f, g, o (PyTorch convention).
        sg = jax.nn.sigmoid(gates)
        i = sg[:, 0 * H:1 * H]
        f = sg[:, 1 * H:2 * H]
        o = sg[:, 3 * H:4 * H]
        g = jnp.tanh(gates[:, 2 * H:3 * H])
        c = f * c + i * g
        h = o * jnp.tanh(c)
        hs.append(h)
    lstm_out = jnp.concatenate(hs, axis=0)                      # (S, H)

    # ---- hidden2tag + log_softmax(dim=1) ----
    tag_space = (jnp.dot(lstm_out, wtag_t_ref[...],
                         preferred_element_type=jnp.float32)
                 + btag_ref[...])                               # (S, T)
    m = jnp.max(tag_space, axis=1, keepdims=True)
    lse = jnp.log(jnp.sum(jnp.exp(tag_space - m), axis=1, keepdims=True)) + m
    out_ref[...] = tag_space - lse
    # TODO(synk): if T grows, pad the lane dim to a multiple of 128 in
    # out_specs and slice in the wrapper so the final store is unmasked.


def prepare_params(params):
    """One-time layout prep (transposes / bias fold) done outside the forward."""
    H = params["w_hh"].shape[1]
    T = params["w_tag"].shape[0]
    return {
        "embedding": params["embedding"],                       # (V, E)
        "wih_t": jnp.transpose(params["w_ih"]),                 # (E, 4H)
        "whh_t": jnp.transpose(params["w_hh"]),                 # (H, 4H)
        "b": (params["b_ih"] + params["b_hh"]).reshape(1, 4 * H),
        "wtag_t": jnp.transpose(params["w_tag"]),               # (H, T)
        "btag": params["b_tag"].reshape(1, T),                  # (1, T)
    }


@jax.jit
def lstm_tagger_forward(sentence, prepped):
    """sentence: (S,) int32 token ids. Returns (S, T) log-probabilities."""
    S = sentence.shape[0]
    T = prepped["wtag_t"].shape[1]

    smem_spec = pl.BlockSpec(memory_space=pltpu.MemorySpace.SMEM)
    vmem_spec = pl.BlockSpec(memory_space=pltpu.MemorySpace.VMEM)

    return pl.pallas_call(
        lstm_tagger_kernel,
        out_shape=jax.ShapeDtypeStruct((S, T), jnp.float32),
        in_specs=[smem_spec] + [vmem_spec] * 6,
        out_specs=vmem_spec,
    )(sentence, prepped["embedding"], prepped["wih_t"], prepped["whh_t"],
      prepped["b"], prepped["wtag_t"], prepped["btag"])


def reference_forward(sentence, params):
    """Pure-JAX reference mirroring the PyTorch module."""
    emb = params["embedding"]
    w_ih, w_hh = params["w_ih"], params["w_hh"]
    b_ih, b_hh = params["b_ih"], params["b_hh"]
    w_tag, b_tag = params["w_tag"], params["b_tag"]
    H = w_hh.shape[1]

    embeds = emb[sentence]                              # (S, E)

    def step(carry, x_t):
        h, c = carry
        gates = x_t @ w_ih.T + b_ih + h @ w_hh.T + b_hh
        i = jax.nn.sigmoid(gates[0 * H:1 * H])
        f = jax.nn.sigmoid(gates[1 * H:2 * H])
        g = jnp.tanh(gates[2 * H:3 * H])
        o = jax.nn.sigmoid(gates[3 * H:4 * H])
        c = f * c + i * g
        h = o * jnp.tanh(c)
        return (h, c), h

    h0 = jnp.zeros((H,), jnp.float32)
    c0 = jnp.zeros((H,), jnp.float32)
    _, lstm_out = lax.scan(step, (h0, c0), embeds)      # (S, H)
    tag_space = lstm_out @ w_tag.T + b_tag              # (S, T)
    return jax.nn.log_softmax(tag_space, axis=1)


def init_params(key, vocab_size, embedding_dim, hidden_dim, tagset_size):
    keys = jax.random.split(key, 7)
    k = 1.0 / jnp.sqrt(hidden_dim)
    kt = 1.0 / jnp.sqrt(hidden_dim)
    return {
        # nn.Embedding: N(0, 1)
        "embedding": jax.random.normal(
            keys[0], (vocab_size, embedding_dim), jnp.float32),
        # nn.LSTM: U(-1/sqrt(H), 1/sqrt(H))
        "w_ih": jax.random.uniform(
            keys[1], (4 * hidden_dim, embedding_dim), jnp.float32, -k, k),
        "w_hh": jax.random.uniform(
            keys[2], (4 * hidden_dim, hidden_dim), jnp.float32, -k, k),
        "b_ih": jax.random.uniform(
            keys[3], (4 * hidden_dim,), jnp.float32, -k, k),
        "b_hh": jax.random.uniform(
            keys[4], (4 * hidden_dim,), jnp.float32, -k, k),
        # nn.Linear: U(-1/sqrt(H), 1/sqrt(H))
        "w_tag": jax.random.uniform(
            keys[5], (tagset_size, hidden_dim), jnp.float32, -kt, kt),
        "b_tag": jax.random.uniform(
            keys[6], (tagset_size,), jnp.float32, -kt, kt),
    }


if __name__ == "__main__":
    EMBEDDING_DIM = 16
    HIDDEN_DIM = 32
    VOCAB_SIZE = 20
    TAGSET_SIZE = 8
    SEQ_LEN = 8

    key = jax.random.PRNGKey(0)
    pkey, skey = jax.random.split(key)
    params = init_params(pkey, VOCAB_SIZE, EMBEDDING_DIM, HIDDEN_DIM,
                         TAGSET_SIZE)
    sentence = jax.random.randint(skey, (SEQ_LEN,), 0, VOCAB_SIZE,
                                  dtype=jnp.int32)

    prepped = jax.tree_util.tree_map(jax.block_until_ready,
                                     prepare_params(params))

    tag_scores = lstm_tagger_forward(sentence, prepped)
    tag_scores = jax.block_until_ready(tag_scores)

    ref = reference_forward(sentence, params)
    assert tag_scores.shape == (SEQ_LEN, TAGSET_SIZE)
    assert jnp.allclose(tag_scores, ref, atol=1e-4), "mismatch vs reference"

    print("KERNEL_OK")
</pallas_src>

<mosaic_0001>
module attributes {stable_mosaic.version = 11 : i64} {
  func.func @lstm_tagger_kernel(%arg0: memref<8xi32, #tpu.memory_space<smem>>, %arg1: memref<20x16xf32, #tpu.memory_space<vmem>>, %arg2: memref<16x128xf32, #tpu.memory_space<vmem>>, %arg3: memref<32x128xf32, #tpu.memory_space<vmem>>, %arg4: memref<1x128xf32, #tpu.memory_space<vmem>>, %arg5: memref<32x8xf32, #tpu.memory_space<vmem>>, %arg6: memref<1x8xf32, #tpu.memory_space<vmem>>, %arg7: memref<8x8xf32, #tpu.memory_space<vmem>>) attributes {dimension_semantics = [], scalar_prefetch = 0 : i64, scratch_operands = 0 : i64, tpu.core_type = #tpu.core_type<tc>} {
    %c0 = arith.constant 0 : index
    %0 = memref.load %arg0[%c0] : memref<8xi32, #tpu.memory_space<smem>>
    %1 = arith.index_cast %0 : i32 to index
    %c0_0 = arith.constant 0 : index
    %2 = vector.load %arg1[%1, %c0_0] : memref<20x16xf32, #tpu.memory_space<vmem>>, vector<1x16xf32>
    %c1 = arith.constant 1 : index
    %3 = memref.load %arg0[%c1] : memref<8xi32, #tpu.memory_space<smem>>
    %4 = arith.index_cast %3 : i32 to index
    %c0_1 = arith.constant 0 : index
    %5 = vector.load %arg1[%4, %c0_1] : memref<20x16xf32, #tpu.memory_space<vmem>>, vector<1x16xf32>
    %c2 = arith.constant 2 : index
    %6 = memref.load %arg0[%c2] : memref<8xi32, #tpu.memory_space<smem>>
    %7 = arith.index_cast %6 : i32 to index
    %c0_2 = arith.constant 0 : index
    %8 = vector.load %arg1[%7, %c0_2] : memref<20x16xf32, #tpu.memory_space<vmem>>, vector<1x16xf32>
    %c3 = arith.constant 3 : index
    %9 = memref.load %arg0[%c3] : memref<8xi32, #tpu.memory_space<smem>>
    %10 = arith.index_cast %9 : i32 to index
    %c0_3 = arith.constant 0 : index
    %11 = vector.load %arg1[%10, %c0_3] : memref<20x16xf32, #tpu.memory_space<vmem>>, vector<1x16xf32>
    %c4 = arith.constant 4 : index
    %12 = memref.load %arg0[%c4] : memref<8xi32, #tpu.memory_space<smem>>
    %13 = arith.index_cast %12 : i32 to index
    %c0_4 = arith.constant 0 : index
    %14 = vector.load %arg1[%13, %c0_4] : memref<20x16xf32, #tpu.memory_space<vmem>>, vector<1x16xf32>
    %c5 = arith.constant 5 : index
    %15 = memref.load %arg0[%c5] : memref<8xi32, #tpu.memory_space<smem>>
    %16 = arith.index_cast %15 : i32 to index
    %c0_5 = arith.constant 0 : index
    %17 = vector.load %arg1[%16, %c0_5] : memref<20x16xf32, #tpu.memory_space<vmem>>, vector<1x16xf32>
    %c6 = arith.constant 6 : index
    %18 = memref.load %arg0[%c6] : memref<8xi32, #tpu.memory_space<smem>>
    %19 = arith.index_cast %18 : i32 to index
    %c0_6 = arith.constant 0 : index
    %20 = vector.load %arg1[%19, %c0_6] : memref<20x16xf32, #tpu.memory_space<vmem>>, vector<1x16xf32>
    %c7 = arith.constant 7 : index
    %21 = memref.load %arg0[%c7] : memref<8xi32, #tpu.memory_space<smem>>
    %22 = arith.index_cast %21 : i32 to index
    %c0_7 = arith.constant 0 : index
    %23 = vector.load %arg1[%22, %c0_7] : memref<20x16xf32, #tpu.memory_space<vmem>>, vector<1x16xf32>
    %24 = tpu.concatenate %2, %5, %8, %11, %14, %17, %20, %23 in 0 : vector<1x16xf32>, vector<1x16xf32>, vector<1x16xf32>, vector<1x16xf32>, vector<1x16xf32>, vector<1x16xf32>, vector<1x16xf32>, vector<1x16xf32> -> vector<8x16xf32>
    %c0_8 = arith.constant 0 : index
    %c0_9 = arith.constant 0 : index
    %25 = vector.load %arg2[%c0_8, %c0_9] : memref<16x128xf32, #tpu.memory_space<vmem>>, vector<16x128xf32>
    %cst = arith.constant dense<0.000000e+00> : vector<8x128xf32>
    %26 = tpu.matmul %24, %25, %cst {dimension_numbers = #tpu.dot_dimension_numbers<[1], [0], [0], [1], [0, 0, 1, 1], [], []>} : vector<8x16xf32>, vector<16x128xf32>, vector<8x128xf32> -> vector<8x128xf32>
    %c0_10 = arith.constant 0 : index
    %c0_11 = arith.constant 0 : index
    %27 = vector.load %arg4[%c0_10, %c0_11] : memref<1x128xf32, #tpu.memory_space<vmem>>, vector<1x128xf32>
    %28 = vector.broadcast %27 : vector<1x128xf32> to vector<8x128xf32>
    %29 = arith.addf %26, %28 : vector<8x128xf32>
    %c0_12 = arith.constant 0 : index
    %c0_13 = arith.constant 0 : index
    %30 = vector.load %arg3[%c0_12, %c0_13] : memref<32x128xf32, #tpu.memory_space<vmem>>, vector<32x128xf32>
    %cst_14 = arith.constant 0.000000e+00 : f32
    %31 = vector.broadcast %cst_14 : f32 to vector<1x32xf32>
    %cst_15 = arith.constant 0.000000e+00 : f32
    %32 = vector.broadcast %cst_15 : f32 to vector<1x32xf32>
    %33 = vector.extract_strided_slice %29 {offsets = [0, 0], sizes = [1, 128], strides = [1, 1]} : vector<8x128xf32> to vector<1x128xf32>
    %cst_16 = arith.constant dense<0.000000e+00> : vector<1x128xf32>
    %34 = tpu.matmul %31, %30, %cst_16 {dimension_numbers = #tpu.dot_dimension_numbers<[1], [0], [0], [1], [0, 0, 1, 1], [], []>} : vector<1x32xf32>, vector<32x128xf32>, vector<1x128xf32> -> vector<1x128xf32>
    %35 = arith.addf %33, %34 : vector<1x128xf32>
    %36 = arith.negf %35 : vector<1x128xf32>
    %37 = math.exp %36 : vector<1x128xf32>
    %cst_17 = arith.constant 1.000000e+00 : f32
    %38 = vector.broadcast %cst_17 : f32 to vector<1x128xf32>
    %39 = arith.addf %38, %37 : vector<1x128xf32>
    %40 = arith.divf %38, %39 : vector<1x128xf32>
    %41 = vector.extract_strided_slice %40 {offsets = [0, 0], sizes = [1, 32], strides = [1, 1]} : vector<1x128xf32> to vector<1x32xf32>
    %42 = vector.extract_strided_slice %40 {offsets = [0, 32], sizes = [1, 32], strides = [1, 1]} : vector<1x128xf32> to vector<1x32xf32>
    %43 = vector.extract_strided_slice %40 {offsets = [0, 96], sizes = [1, 32], strides = [1, 1]} : vector<1x128xf32> to vector<1x32xf32>
    %44 = vector.extract_strided_slice %35 {offsets = [0, 64], sizes = [1, 32], strides = [1, 1]} : vector<1x128xf32> to vector<1x32xf32>
    %45 = math.tanh %44 : vector<1x32xf32>
    %46 = arith.mulf %42, %32 : vector<1x32xf32>
    %47 = arith.mulf %41, %45 : vector<1x32xf32>
    %48 = arith.addf %46, %47 : vector<1x32xf32>
    %49 = math.tanh %48 : vector<1x32xf32>
    %50 = arith.mulf %43, %49 : vector<1x32xf32>
    %51 = vector.extract_strided_slice %29 {offsets = [1, 0], sizes = [1, 128], strides = [1, 1]} : vector<8x128xf32> to vector<1x128xf32>
    %cst_18 = arith.constant dense<0.000000e+00> : vector<1x128xf32>
    %52 = tpu.matmul %50, %30, %cst_18 {dimension_numbers = #tpu.dot_dimension_numbers<[1], [0], [0], [1], [0, 0, 1, 1], [], []>} : vector<1x32xf32>, vector<32x128xf32>, vector<1x128xf32> -> vector<1x128xf32>
    %53 = arith.addf %51, %52 : vector<1x128xf32>
    %54 = arith.negf %53 : vector<1x128xf32>
    %55 = math.exp %54 : vector<1x128xf32>
    %cst_19 = arith.constant 1.000000e+00 : f32
    %56 = vector.broadcast %cst_19 : f32 to vector<1x128xf32>
    %57 = arith.addf %56, %55 : vector<1x128xf32>
    %58 = arith.divf %56, %57 : vector<1x128xf32>
    %59 = vector.extract_strided_slice %58 {offsets = [0, 0], sizes = [1, 32], strides = [1, 1]} : vector<1x128xf32> to vector<1x32xf32>
    %60 = vector.extract_strided_slice %58 {offsets = [0, 32], sizes = [1, 32], strides = [1, 1]} : vector<1x128xf32> to vector<1x32xf32>
    %61 = vector.extract_strided_slice %58 {offsets = [0, 96], sizes = [1, 32], strides = [1, 1]} : vector<1x128xf32> to vector<1x32xf32>
    %62 = vector.extract_strided_slice %53 {offsets = [0, 64], sizes = [1, 32], strides = [1, 1]} : vector<1x128xf32> to vector<1x32xf32>
    %63 = math.tanh %62 : vector<1x32xf32>
    %64 = arith.mulf %60, %48 : vector<1x32xf32>
    %65 = arith.mulf %59, %63 : vector<1x32xf32>
    %66 = arith.addf %64, %65 : vector<1x32xf32>
    %67 = math.tanh %66 : vector<1x32xf32>
    %68 = arith.mulf %61, %67 : vector<1x32xf32>
    %69 = vector.extract_strided_slice %29 {offsets = [2, 0], sizes = [1, 128], strides = [1, 1]} : vector<8x128xf32> to vector<1x128xf32>
    %cst_20 = arith.constant dense<0.000000e+00> : vector<1x128xf32>
    %70 = tpu.matmul %68, %30, %cst_20 {dimension_numbers = #tpu.dot_dimension_numbers<[1], [0], [0], [1], [0, 0, 1, 1], [], []>} : vector<1x32xf32>, vector<32x128xf32>, vector<1x128xf32> -> vector<1x128xf32>
    %71 = arith.addf %69, %70 : vector<1x128xf32>
    %72 = arith.negf %71 : vector<1x128xf32>
    %73 = math.exp %72 : vector<1x128xf32>
    %cst_21 = arith.constant 1.000000e+00 : f32
    %74 = vector.broadcast %cst_21 : f32 to vector<1x128xf32>
    %75 = arith.addf %74, %73 : vector<1x128xf32>
    %76 = arith.divf %74, %75 : vector<1x128xf32>
    %77 = vector.extract_strided_slice %76 {offsets = [0, 0], sizes = [1, 32], strides = [1, 1]} : vector<1x128xf32> to vector<1x32xf32>
    %78 = vector.extract_strided_slice %76 {offsets = [0, 32], sizes = [1, 32], strides = [1, 1]} : vector<1x128xf32> to vector<1x32xf32>
    %79 = vector.extract_strided_slice %76 {offsets = [0, 96], sizes = [1, 32], strides = [1, 1]} : vector<1x128xf32> to vector<1x32xf32>
    %80 = vector.extract_strided_slice %71 {offsets = [0, 64], sizes = [1, 32], strides = [1, 1]} : vector<1x128xf32> to vector<1x32xf32>
    %81 = math.tanh %80 : vector<1x32xf32>
    %82 = arith.mulf %78, %66 : vector<1x32xf32>
    %83 = arith.mulf %77, %81 : vector<1x32xf32>
    %84 = arith.addf %82, %83 : vector<1x32xf32>
    %85 = math.tanh %84 : vector<1x32xf32>
    %86 = arith.mulf %79, %85 : vector<1x32xf32>
    %87 = vector.extract_strided_slice %29 {offsets = [3, 0], sizes = [1, 128], strides = [1, 1]} : vector<8x128xf32> to vector<1x128xf32>
    %cst_22 = arith.constant dense<0.000000e+00> : vector<1x128xf32>
    %88 = tpu.matmul %86, %30, %cst_22 {dimension_numbers = #tpu.dot_dimension_numbers<[1], [0], [0], [1], [0, 0, 1, 1], [], []>} : vector<1x32xf32>, vector<32x128xf32>, vector<1x128xf32> -> vector<1x128xf32>
    %89 = arith.addf %87, %88 : vector<1x128xf32>
    %90 = arith.negf %89 : vector<1x128xf32>
    %91 = math.exp %90 : vector<1x128xf32>
    %cst_23 = arith.constant 1.000000e+00 : f32
    %92 = vector.broadcast %cst_23 : f32 to vector<1x128xf32>
    %93 = arith.addf %92, %91 : vector<1x128xf32>
    %94 = arith.divf %92, %93 : vector<1x128xf32>
    %95 = vector.extract_strided_slice %94 {offsets = [0, 0], sizes = [1, 32], strides = [1, 1]} : vector<1x128xf32> to vector<1x32xf32>
    %96 = vector.extract_strided_slice %94 {offsets = [0, 32], sizes = [1, 32], strides = [1, 1]} : vector<1x128xf32> to vector<1x32xf32>
    %97 = vector.extract_strided_slice %94 {offsets = [0, 96], sizes = [1, 32], strides = [1, 1]} : vector<1x128xf32> to vector<1x32xf32>
    %98 = vector.extract_strided_slice %89 {offsets = [0, 64], sizes = [1, 32], strides = [1, 1]} : vector<1x128xf32> to vector<1x32xf32>
    %99 = math.tanh %98 : vector<1x32xf32>
    %100 = arith.mulf %96, %84 : vector<1x32xf32>
    %101 = arith.mulf %95, %99 : vector<1x32xf32>
    %102 = arith.addf %100, %101 : vector<1x32xf32>
    %103 = math.tanh %102 : vector<1x32xf32>
    %104 = arith.mulf %97, %103 : vector<1x32xf32>
    %105 = vector.extract_strided_slice %29 {offsets = [4, 0], sizes = [1, 128], strides = [1, 1]} : vector<8x128xf32> to vector<1x128xf32>
    %cst_24 = arith.constant dense<0.000000e+00> : vector<1x128xf32>
    %106 = tpu.matmul %104, %30, %cst_24 {dimension_numbers = #tpu.dot_dimension_numbers<[1], [0], [0], [1], [0, 0, 1, 1], [], []>} : vector<1x32xf32>, vector<32x128xf32>, vector<1x128xf32> -> vector<1x128xf32>
    %107 = arith.addf %105, %106 : vector<1x128xf32>
    %108 = arith.negf %107 : vector<1x128xf32>
    %109 = math.exp %108 : vector<1x128xf32>
    %cst_25 = arith.constant 1.000000e+00 : f32
    %110 = vector.broadcast %cst_25 : f32 to vector<1x128xf32>
    %111 = arith.addf %110, %109 : vector<1x128xf32>
    %112 = arith.divf %110, %111 : vector<1x128xf32>
    %113 = vector.extract_strided_slice %112 {offsets = [0, 0], sizes = [1, 32], strides = [1, 1]} : vector<1x128xf32> to vector<1x32xf32>
    %114 = vector.extract_strided_slice %112 {offsets = [0, 32], sizes = [1, 32], strides = [1, 1]} : vector<1x128xf32> to vector<1x32xf32>
    %115 = vector.extract_strided_slice %112 {offsets = [0, 96], sizes = [1, 32], strides = [1, 1]} : vector<1x128xf32> to vector<1x32xf32>
    %116 = vector.extract_strided_slice %107 {offsets = [0, 64], sizes = [1, 32], strides = [1, 1]} : vector<1x128xf32> to vector<1x32xf32>
    %117 = math.tanh %116 : vector<1x32xf32>
    %118 = arith.mulf %114, %102 : vector<1x32xf32>
    %119 = arith.mulf %113, %117 : vector<1x32xf32>
    %120 = arith.addf %118, %119 : vector<1x32xf32>
    %121 = math.tanh %120 : vector<1x32xf32>
    %122 = arith.mulf %115, %121 : vector<1x32xf32>
    %123 = vector.extract_strided_slice %29 {offsets = [5, 0], sizes = [1, 128], strides = [1, 1]} : vector<8x128xf32> to vector<1x128xf32>
    %cst_26 = arith.constant dense<0.000000e+00> : vector<1x128xf32>
    %124 = tpu.matmul %122, %30, %cst_26 {dimension_numbers = #tpu.dot_dimension_numbers<[1], [0], [0], [1], [0, 0, 1, 1], [], []>} : vector<1x32xf32>, vector<32x128xf32>, vector<1x128xf32> -> vector<1x128xf32>
    %125 = arith.addf %123, %124 : vector<1x128xf32>
    %126 = arith.negf %125 : vector<1x128xf32>
    %127 = math.exp %126 : vector<1x128xf32>
    %cst_27 = arith.constant 1.000000e+00 : f32
    %128 = vector.broadcast %cst_27 : f32 to vector<1x128xf32>
    %129 = arith.addf %128, %127 : vector<1x128xf32>
    %130 = arith.divf %128, %129 : vector<1x128xf32>
    %131 = vector.extract_strided_slice %130 {offsets = [0, 0], sizes = [1, 32], strides = [1, 1]} : vector<1x128xf32> to vector<1x32xf32>
    %132 = vector.extract_strided_slice %130 {offsets = [0, 32], sizes = [1, 32], strides = [1, 1]} : vector<1x128xf32> to vector<1x32xf32>
    %133 = vector.extract_strided_slice %130 {offsets = [0, 96], sizes = [1, 32], strides = [1, 1]} : vector<1x128xf32> to vector<1x32xf32>
    %134 = vector.extract_strided_slice %125 {offsets = [0, 64], sizes = [1, 32], strides = [1, 1]} : vector<1x128xf32> to vector<1x32xf32>
    %135 = math.tanh %134 : vector<1x32xf32>
    %136 = arith.mulf %132, %120 : vector<1x32xf32>
    %137 = arith.mulf %131, %135 : vector<1x32xf32>
    %138 = arith.addf %136, %137 : vector<1x32xf32>
    %139 = math.tanh %138 : vector<1x32xf32>
    %140 = arith.mulf %133, %139 : vector<1x32xf32>
    %141 = vector.extract_strided_slice %29 {offsets = [6, 0], sizes = [1, 128], strides = [1, 1]} : vector<8x128xf32> to vector<1x128xf32>
    %cst_28 = arith.constant dense<0.000000e+00> : vector<1x128xf32>
    %142 = tpu.matmul %140, %30, %cst_28 {dimension_numbers = #tpu.dot_dimension_numbers<[1], [0], [0], [1], [0, 0, 1, 1], [], []>} : vector<1x32xf32>, vector<32x128xf32>, vector<1x128xf32> -> vector<1x128xf32>
    %143 = arith.addf %141, %142 : vector<1x128xf32>
    %144 = arith.negf %143 : vector<1x128xf32>
    %145 = math.exp %144 : vector<1x128xf32>
    %cst_29 = arith.constant 1.000000e+00 : f32
    %146 = vector.broadcast %cst_29 : f32 to vector<1x128xf32>
    %147 = arith.addf %146, %145 : vector<1x128xf32>
    %148 = arith.divf %146, %147 : vector<1x128xf32>
    %149 = vector.extract_strided_slice %148 {offsets = [0, 0], sizes = [1, 32], strides = [1, 1]} : vector<1x128xf32> to vector<1x32xf32>
    %150 = vector.extract_strided_slice %148 {offsets = [0, 32], sizes = [1, 32], strides = [1, 1]} : vector<1x128xf32> to vector<1x32xf32>
    %151 = vector.extract_strided_slice %148 {offsets = [0, 96], sizes = [1, 32], strides = [1, 1]} : vector<1x128xf32> to vector<1x32xf32>
    %152 = vector.extract_strided_slice %143 {offsets = [0, 64], sizes = [1, 32], strides = [1, 1]} : vector<1x128xf32> to vector<1x32xf32>
    %153 = math.tanh %152 : vector<1x32xf32>
    %154 = arith.mulf %150, %138 : vector<1x32xf32>
    %155 = arith.mulf %149, %153 : vector<1x32xf32>
    %156 = arith.addf %154, %155 : vector<1x32xf32>
    %157 = math.tanh %156 : vector<1x32xf32>
    %158 = arith.mulf %151, %157 : vector<1x32xf32>
    %159 = vector.extract_strided_slice %29 {offsets = [7, 0], sizes = [1, 128], strides = [1, 1]} : vector<8x128xf32> to vector<1x128xf32>
    %cst_30 = arith.constant dense<0.000000e+00> : vector<1x128xf32>
    %160 = tpu.matmul %158, %30, %cst_30 {dimension_numbers = #tpu.dot_dimension_numbers<[1], [0], [0], [1], [0, 0, 1, 1], [], []>} : vector<1x32xf32>, vector<32x128xf32>, vector<1x128xf32> -> vector<1x128xf32>
    %161 = arith.addf %159, %160 : vector<1x128xf32>
    %162 = arith.negf %161 : vector<1x128xf32>
    %163 = math.exp %162 : vector<1x128xf32>
    %cst_31 = arith.constant 1.000000e+00 : f32
    %164 = vector.broadcast %cst_31 : f32 to vector<1x128xf32>
    %165 = arith.addf %164, %163 : vector<1x128xf32>
    %166 = arith.divf %164, %165 : vector<1x128xf32>
    %167 = vector.extract_strided_slice %166 {offsets = [0, 0], sizes = [1, 32], strides = [1, 1]} : vector<1x128xf32> to vector<1x32xf32>
    %168 = vector.extract_strided_slice %166 {offsets = [0, 32], sizes = [1, 32], strides = [1, 1]} : vector<1x128xf32> to vector<1x32xf32>
    %169 = vector.extract_strided_slice %166 {offsets = [0, 96], sizes = [1, 32], strides = [1, 1]} : vector<1x128xf32> to vector<1x32xf32>
    %170 = vector.extract_strided_slice %161 {offsets = [0, 64], sizes = [1, 32], strides = [1, 1]} : vector<1x128xf32> to vector<1x32xf32>
    %171 = math.tanh %170 : vector<1x32xf32>
    %172 = arith.mulf %168, %156 : vector<1x32xf32>
    %173 = arith.mulf %167, %171 : vector<1x32xf32>
    %174 = arith.addf %172, %173 : vector<1x32xf32>
    %175 = math.tanh %174 : vector<1x32xf32>
    %176 = arith.mulf %169, %175 : vector<1x32xf32>
    %177 = tpu.concatenate %50, %68, %86, %104, %122, %140, %158, %176 in 0 : vector<1x32xf32>, vector<1x32xf32>, vector<1x32xf32>, vector<1x32xf32>, vector<1x32xf32>, vector<1x32xf32>, vector<1x32xf32>, vector<1x32xf32> -> vector<8x32xf32>
    %c0_32 = arith.constant 0 : index
    %c0_33 = arith.constant 0 : index
    %178 = vector.load %arg5[%c0_32, %c0_33] : memref<32x8xf32, #tpu.memory_space<vmem>>, vector<32x8xf32>
    %cst_34 = arith.constant dense<0.000000e+00> : vector<8x8xf32>
    %179 = tpu.matmul %177, %178, %cst_34 {dimension_numbers = #tpu.dot_dimension_numbers<[1], [0], [0], [1], [0, 0, 1, 1], [], []>} : vector<8x32xf32>, vector<32x8xf32>, vector<8x8xf32> -> vector<8x8xf32>
    %c0_35 = arith.constant 0 : index
    %c0_36 = arith.constant 0 : index
    %180 = vector.load %arg6[%c0_35, %c0_36] : memref<1x8xf32, #tpu.memory_space<vmem>>, vector<1x8xf32>
    %181 = vector.broadcast %180 : vector<1x8xf32> to vector<8x8xf32>
    %182 = arith.addf %179, %181 : vector<8x8xf32>
    %cst_37 = arith.constant dense<0xFF800000> : vector<8xf32>
    %183 = vector.multi_reduction <maximumf>, %182, %cst_37 [1] : vector<8x8xf32> to vector<8xf32>
    %184 = vector.shape_cast %183 : vector<8xf32> to vector<8x1xf32>
    %185 = vector.broadcast %184 : vector<8x1xf32> to vector<8x8xf32>
    %186 = arith.subf %182, %185 : vector<8x8xf32>
    %187 = math.exp %186 : vector<8x8xf32>
    %cst_38 = arith.constant dense<0.000000e+00> : vector<8xf32>
    %188 = vector.multi_reduction <add>, %187, %cst_38 [1] : vector<8x8xf32> to vector<8xf32>
    %189 = vector.shape_cast %188 : vector<8xf32> to vector<8x1xf32>
    %190 = math.log %189 : vector<8x1xf32>
    %191 = arith.addf %190, %184 : vector<8x1xf32>
    %192 = vector.broadcast %191 : vector<8x1xf32> to vector<8x8xf32>
    %193 = arith.subf %182, %192 : vector<8x8xf32>
    %c0_39 = arith.constant 0 : index
    %c0_40 = arith.constant 0 : index
    %194 = vector.load %arg7[%c0_39, %c0_40] : memref<8x8xf32, #tpu.memory_space<vmem>>, vector<8x8xf32>
    tpu.vector_store %arg7[%c0_39, %c0_40], %193 {strides = array<i32>} : memref<8x8xf32, #tpu.memory_space<vmem>>, vector<8x8xf32>,
    return
  }
}

</mosaic_0001>

<llo_original>
// kernel: lstm_tagger_forward.1
$region0: #{lstm_tagger_forward.1}
  #allocation0 [shape = 'u32[]', space=smem, size = 0x4, offset = 0x4, fixed_abs, tag = 'smem constant byte address 0x4 - core index']
  #allocation1 [shape = 'u32[72,128]{1,0:T(1,128)}', space=vmem, size = 0x9000, scoped, tag = 'internal scratch']
  %s0 = inlined_call_operand.vmem [shape: s32[8], index: 0, kind: input, shape index: {}]
  %s1 = inlined_call_operand.vmem [shape: f32[20,16], index: 1, kind: input, shape index: {}]
  %s2 = inlined_call_operand.vmem [shape: f32[16,128], index: 2, kind: input, shape index: {}]
  %s3 = inlined_call_operand.vmem [shape: f32[32,128], index: 3, kind: input, shape index: {}]
  %s4 = inlined_call_operand.vmem [shape: f32[1,128], index: 4, kind: input, shape index: {}]
  %s5 = inlined_call_operand.vmem [shape: f32[32,8], index: 5, kind: input, shape index: {}]
  %s6 = inlined_call_operand.vmem [shape: f32[1,8], index: 6, kind: input, shape index: {}]
  %s7 = inlined_call_operand.hbm [shape: f32[8,8], index: 7, kind: output, shape index: {}]
  %s8 = sld [smem:[#allocation0]]
  $region42: #{lstm_tagger_forward.1} parent=0
    _
  %s10 = ssub.s32 1, %s8
  %s11 = scalar_select 0, %s10, %s8
  $region1: #{lstm_tagger_forward.1} parent=0
    #allocation2 [shape = 'u8[512]{0}', space=smem, size = 0x200, scoped, tag = 'input window, operand 0, single buffered']
    #allocation3 [shape = 's32[1]{0}', space=sflag, size = 0x4, scoped, tag = 'scoped memory for lstm_tagger_forward.1']
    #allocation4 [shape = 's32[1]{0}', space=sflag, size = 0x4, scoped, tag = 'scoped memory for lstm_tagger_forward.1']
    #allocation5 [shape = 'u8[4096]{0}', space=vmem, size = 0x1000, scoped, tag = 'output window, operand 0, single buffered']
    %12 = vsyncpa [#allocation4], 0
    %13 = vsyncpa [#allocation3], 0
    // Predicated region
    $region2: #{lstm_tagger_forward.1} parent=1 // pred_check
      _
    $region3: #{lstm_tagger_forward.1} parent=1 // pred_check_branch
      %15 = sbr.rel (0) target = $region5
    $region4: #{lstm_tagger_forward.1} parent=1 // pred_region
      %17 = vsyncadd [#allocation4], 0
      %s19 = sshll.u32 %s0, 4
      %s20 = int_to_ptr.vmem [resolvable:$true] %s19
      %22 = dma.vmem_to_smem %s20, 16, [#allocation2], [#allocation4]
    $region5: #{lstm_tagger_forward.1} parent=1 // pred_fallthru
      _
    // Predicated region
    $region6: #{lstm_tagger_forward.1} parent=1 // pred_check
      _
    $region7: #{lstm_tagger_forward.1} parent=1 // pred_check_branch
      %24 = sbr.rel (0) target = $region9
    $region8: #{lstm_tagger_forward.1} parent=1 // pred_region
      _
    $region9: #{lstm_tagger_forward.1} parent=1 // pred_fallthru
      _
    // Predicated region
    $region10: #{lstm_tagger_forward.1} parent=1 // pred_check
      _
    $region11: #{lstm_tagger_forward.1} parent=1 // pred_check_branch
      %26 = sbr.rel (0) target = $region13
    $region12: #{lstm_tagger_forward.1} parent=1 // pred_region
      _
    $region13: #{lstm_tagger_forward.1} parent=1 // pred_fallthru
      _
    // Predicated region
    $region14: #{lstm_tagger_forward.1} parent=1 // pred_check
      _
    $region15: #{lstm_tagger_forward.1} parent=1 // pred_check_branch
      %28 = sbr.rel (0) target = $region17
    $region16: #{lstm_tagger_forward.1} parent=1 // pred_region
      _
    $region17: #{lstm_tagger_forward.1} parent=1 // pred_fallthru
      _
    // Predicated region
    $region18: #{lstm_tagger_forward.1} parent=1 // pred_check
      _
    $region19: #{lstm_tagger_forward.1} parent=1 // pred_check_branch
      %30 = sbr.rel (0) target = $region21
    $region20: #{lstm_tagger_forward.1} parent=1 // pred_region
      _
    $region21: #{lstm_tagger_forward.1} parent=1 // pred_fallthru
      _
    // Predicated region
    $region22: #{lstm_tagger_forward.1} parent=1 // pred_check
      _
    $region23: #{lstm_tagger_forward.1} parent=1 // pred_check_branch
      %32 = sbr.rel (0) target = $region25
    $region24: #{lstm_tagger_forward.1} parent=1 // pred_region
      _
    $region25: #{lstm_tagger_forward.1} parent=1 // pred_fallthru
      _
    // Predicated region
    $region26: #{lstm_tagger_forward.1} parent=1 // pred_check
      _
    $region27: #{lstm_tagger_forward.1} parent=1 // pred_check_branch
      %34 = sbr.rel (0) target = $region29
    $region28: #{lstm_tagger_forward.1} parent=1 // pred_region
      _
    $region29: #{lstm_tagger_forward.1} parent=1 // pred_fallthru
      _
    // Predicated region
    $region30: #{lstm_tagger_forward.1} parent=1 // pred_check
      _
    $region31: #{lstm_tagger_forward.1} parent=1 // pred_check_branch
      %36 = sbr.rel (0) target = $region33
    $region32: #{lstm_tagger_forward.1} parent=1 // pred_region
      %38 = dma.done [#allocation4], 16
    $region33: #{lstm_tagger_forward.1} parent=1 // pred_fallthru
      _
    %39 = sfence
    %s40 = sld [smem:[#allocation2]]
    %s41 = scalar_lea.vmem %s1, %s40
    %v42 = vld [vmem:[%s41] sm:$0x1]
    %s43 = sld [smem:[#allocation2 + $0x1]]
    %s44 = scalar_lea.vmem %s1, %s43
    %v45 = vld [vmem:[%s44] sm:$0x1]
    %s46 = sld [smem:[#allocation2 + $0x2]]
    %s47 = scalar_lea.vmem %s1, %s46
    %v48 = vld [vmem:[%s47] sm:$0x1]
    %s49 = sld [smem:[#allocation2 + $0x3]]
    %s50 = scalar_lea.vmem %s1, %s49
    %v51 = vld [vmem:[%s50] sm:$0x1]
    %s52 = sld [smem:[#allocation2 + $0x4]]
    %s53 = scalar_lea.vmem %s1, %s52
    %v54 = vld [vmem:[%s53] sm:$0x1]
    %s55 = sld [smem:[#allocation2 + $0x5]]
    %s56 = scalar_lea.vmem %s1, %s55
    %v57 = vld [vmem:[%s56] sm:$0x1]
    %s58 = sld [smem:[#allocation2 + $0x6]]
    %s59 = scalar_lea.vmem %s1, %s58
    %v60 = vld [vmem:[%s59] sm:$0x1]
    %s61 = sld [smem:[#allocation2 + $0x7]]
    %s62 = scalar_lea.vmem %s1, %s61
    %v63 = vld [vmem:[%s62] sm:$0x1]
    %v65 = vrot.slane %v45, 7
    %v68 = vrot.slane %v48, 6
    %v71 = vrot.slane %v51, 5
    %v74 = vrot.slane %v54, 4
    %v77 = vrot.slane %v57, 3
    %v80 = vrot.slane %v60, 2
    %v83 = vrot.slane %v63, 1
    %vm85 = vcmask 1040384
    %v86 = vsel %vm85, %v42, %v65
    %vm87 = vcmask 1041408
    %v88 = vsel %vm87, %v86, %v68
    %vm89 = vcmask 1042432
    %v90 = vsel %vm89, %v88, %v71
    %vm91 = vcmask 1043456
    %v92 = vsel %vm91, %v90, %v74
    %vm93 = vcmask 1044480
    %v94 = vsel %vm93, %v92, %v77
    %vm95 = vcmask 1045504
    %v96 = vsel %vm95, %v94, %v80
    %vm97 = vcmask 1046528
    %v98 = vsel %vm97, %v96, %v83
    %v99 = vld [vmem:[%s2] sm:$0xff]
    %v100 = vld [vmem:[%s2 + $0x8] sm:$0xff]
    %v101 = vld [vmem:[%s4] sm:$0x1]
    %v103 = vperm.slane %v101, 0
    %vm105 = vcmask 130048
    %v107 = vsel %vm105, %v98, 0
    %109 = vmatpush.msra.mxu0 0.0
    %110 = vmatpush.msra.mxu0 0.0
    %111 = vmatpush.msra.mxu0 0.0
    %112 = vmatpush.msra.mxu0 0.0
    %113 = vmatpush.msra.mxu0 0.0
    %114 = vmatpush.msra.mxu0 0.0
    %115 = vmatpush.msra.mxu0 0.0
    %116 = vmatpush.msra.mxu0 0.0
    %117 = vmatpush.msra.mxu0 0.0
    %118 = vmatpush.msra.mxu0 0.0
    %119 = vmatpush.msra.mxu0 0.0
    %120 = vmatpush.msra.mxu0 0.0
    %121 = vmatpush.msra.mxu0 0.0
    %122 = vmatpush.msra.mxu0 0.0
    %123 = vmatpush.msra.mxu0 %v100
    %124 = vmatpush.msra.mxu0 %v99
    %125 = vmatmul.f32.gmra.mxu0 %v107
    %v126 = vpop.f32.mrf.mxu0
    %v127 = vadd.f32 %v103, %v126
    %128 = vdwg.mxu0
    %v129 = vld [vmem:[%s3] sm:$0xff]
    %v130 = vld [vmem:[%s3 + $0x8] sm:$0xff]
    %v131 = vld [vmem:[%s3 + $0x10] sm:$0xff]
    %v132 = vld [vmem:[%s3 + $0x18] sm:$0xff]
    %vm133 = vcmask 261120
    %v135 = vsel %vm133, 0.0, 0
    %137 = vmatpush.msra.mxu0 0.0
    %138 = vmatpush.msra.mxu0 0.0
    %139 = vmatpush.msra.mxu0 0.0
    %140 = vmatpush.msra.mxu0 0.0
    %141 = vmatpush.msra.mxu0 0.0
    %142 = vmatpush.msra.mxu0 0.0
    %143 = vmatpush.msra.mxu0 0.0
    %144 = vmatpush.msra.mxu0 0.0
    %145 = vmatpush.msra.mxu0 0.0
    %146 = vmatpush.msra.mxu0 0.0
    %147 = vmatpush.msra.mxu0 0.0
    %148 = vmatpush.msra.mxu0 0.0
    %149 = vmatpush.msra.mxu0 %v132
    %150 = vmatpush.msra.mxu0 %v131
    %151 = vmatpush.msra.mxu0 %v130
    %152 = vmatpush.msra.mxu0 %v129
    %153 = vmatmul.f32.gmra.mxu0 %v135
    %v154 = vpop.f32.mrf.mxu0
    %v155 = vadd.f32 0.0, %v154
    %156 = vdwg.mxu0
    %v157 = vadd.f32 %v127, %v155
    %v158 = vxor.u32 %v157, 2147483648
    %v159 = vmul.f32 %v158, 1.442695
    %v160 = vpow.pop %v159
    %v161 = vadd.f32 %v160, 1.0
    %v162 = vrcp.pop %v161
    %v163 = vmul.f32 %v161, %v162
    %v164 = vsub.f32 1.0, %v163
    %v165 = vmul.f32 %v162, %v164
    %v166 = vadd.f32 %v162, %v165
    %vm167 = vweird.f32 %v161
    %vm168 = vweird.f32 %v162
    %vm169 = vmor %vm167, %vm168
    %v170 = vsel %vm169, %v162, %v166
    %v171 = vand.u32 2147483647, %v161
    %vm172 = vcmp.eq.f32.partialorder %v171, 8.507059e+37
    %v173 = vand.u32 %v161, 2147483648
    %v174 = vor.u32 1.1754944e-38, %v173
    %v175 = vsel %vm172, %v174, %v170
    %v176 = vmul.f32 1.0, %v175
    %v177 = vtanh.pop %v157
    %v178 = vmul.f32 %v176, 0.0
    %180 = vrot.lane.b32.xlu0 %v177, 64
    %v181 = vpop.permute.xlu0 %180
    %v183 = vmul.f32 %v176, %v181
    %185 = vrot.lane.b32.xlu0 %v183, 32
    %v186 = vpop.permute.xlu0 %185
    %v188 = vadd.f32 %v178, %v186
    %v189 = vtanh.pop %v188
    %191 = vrot.lane.b32.xlu0 %v189, 64
    %v192 = vpop.permute.xlu0 %191
    %v194 = vmul.f32 %v176, %v192
    %196 = vrot.lane.b32.xlu0 %v194, 32
    %v197 = vpop.permute.xlu0 %196
    %v198 = vsel %vm133, %v197, 0
    %200 = vmatpush.msra.mxu0 0.0
    %201 = vmatpush.msra.mxu0 0.0
    %202 = vmatpush.msra.mxu0 0.0
    %203 = vmatpush.msra.mxu0 0.0
    %204 = vmatpush.msra.mxu0 0.0
    %205 = vmatpush.msra.mxu0 0.0
    %206 = vmatpush.msra.mxu0 0.0
    %207 = vmatpush.msra.mxu0 0.0
    %208 = vmatpush.msra.mxu0 0.0
    %209 = vmatpush.msra.mxu0 0.0
    %210 = vmatpush.msra.mxu0 0.0
    %211 = vmatpush.msra.mxu0 0.0
    %212 = vmatpush.msra.mxu0 %v132
    %213 = vmatpush.msra.mxu0 %v131
    %214 = vmatpush.msra.mxu0 %v130
    %215 = vmatpush.msra.mxu0 %v129
    %216 = vmatmul.f32.gmra.mxu0 %v198
    %v217 = vpop.f32.mrf.mxu0
    %v218 = vadd.f32 0.0, %v217
    %219 = vdwg.mxu0
    %v221 = vrot.slane %v218, 7
    %v223 = vadd.f32 %v127, %v221
    %v224 = vxor.u32 %v223, 2147483648
    %v225 = vmul.f32 %v224, 1.442695
    %v226 = vpow.pop %v225
    %v227 = vadd.f32 %v226, 1.0
    %v228 = vrcp.pop %v227
    %v229 = vmul.f32 %v227, %v228
    %v230 = vsub.f32 1.0, %v229
    %v231 = vmul.f32 %v228, %v230
    %v232 = vadd.f32 %v228, %v231
    %vm233 = vweird.f32 %v227
    %vm234 = vweird.f32 %v228
    %vm235 = vmor %vm233, %vm234
    %v236 = vsel %vm235, %v228, %v232
    %v237 = vand.u32 2147483647, %v227
    %vm238 = vcmp.eq.f32.partialorder %v237, 8.507059e+37
    %v239 = vand.u32 %v227, 2147483648
    %v240 = vor.u32 1.1754944e-38, %v239
    %v241 = vsel %vm238, %v240, %v236
    %v242 = vmul.f32 1.0, %v241
    %v243 = vtanh.pop %v223
    %v245 = vrot.slane %v188, 7
    %v247 = vmul.f32 %v242, %v245
    %249 = vrot.lane.b32.xlu0 %v243, 64
    %v250 = vpop.permute.xlu0 %249
    %v252 = vmul.f32 %v242, %v250
    %254 = vrot.lane.b32.xlu0 %v252, 32
    %v255 = vpop.permute.xlu0 %254
    %v257 = vadd.f32 %v247, %v255
    %v258 = vtanh.pop %v257
    %260 = vrot.lane.b32.xlu0 %v258, 64
    %v261 = vpop.permute.xlu0 %260
    %v263 = vmul.f32 %v242, %v261
    %v265 = vrot.slane %v263, 1
    %266 = vrot.lane.b32.xlu0 %v265, 32
    %v267 = vpop.permute.xlu0 %266
    %v268 = vsel %vm133, %v267, 0
    %270 = vmatpush.msra.mxu0 0.0
    %271 = vmatpush.msra.mxu0 0.0
    %272 = vmatpush.msra.mxu0 0.0
    %273 = vmatpush.msra.mxu0 0.0
    %274 = vmatpush.msra.mxu0 0.0
    %275 = vmatpush.msra.mxu0 0.0
    %276 = vmatpush.msra.mxu0 0.0
    %277 = vmatpush.msra.mxu0 0.0
    %278 = vmatpush.msra.mxu0 0.0
    %279 = vmatpush.msra.mxu0 0.0
    %280 = vmatpush.msra.mxu0 0.0
    %281 = vmatpush.msra.mxu0 0.0
    %282 = vmatpush.msra.mxu0 %v132
    %283 = vmatpush.msra.mxu0 %v131
    %284 = vmatpush.msra.mxu0 %v130
    %285 = vmatpush.msra.mxu0 %v129
    %286 = vmatmul.f32.gmra.mxu0 %v268
    %v287 = vpop.f32.mrf.mxu0
    %v288 = vadd.f32 0.0, %v287
    %289 = vdwg.mxu0
    %v291 = vrot.slane %v288, 6
    %v293 = vadd.f32 %v127, %v291
    %v294 = vxor.u32 %v293, 2147483648
    %v295 = vmul.f32 %v294, 1.442695
    %v296 = vpow.pop %v295
    %v297 = vadd.f32 %v296, 1.0
    %v298 = vrcp.pop %v297
    %v299 = vmul.f32 %v297, %v298
    %v300 = vsub.f32 1.0, %v299
    %v301 = vmul.f32 %v298, %v300
    %v302 = vadd.f32 %v298, %v301
    %vm303 = vweird.f32 %v297
    %vm304 = vweird.f32 %v298
    %vm305 = vmor %vm303, %vm304
    %v306 = vsel %vm305, %v298, %v302
    %v307 = vand.u32 2147483647, %v297
    %vm308 = vcmp.eq.f32.partialorder %v307, 8.507059e+37
    %v309 = vand.u32 %v297, 2147483648
    %v310 = vor.u32 1.1754944e-38, %v309
    %v311 = vsel %vm308, %v310, %v306
    %v312 = vmul.f32 1.0, %v311
    %v313 = vtanh.pop %v293
    %v315 = vrot.slane %v257, 7
    %v317 = vmul.f32 %v312, %v315
    %319 = vrot.lane.b32.xlu0 %v313, 64
    %v320 = vpop.permute.xlu0 %319
    %v322 = vmul.f32 %v312, %v320
    %324 = vrot.lane.b32.xlu0 %v322, 32
    %v325 = vpop.permute.xlu0 %324
    %v327 = vadd.f32 %v317, %v325
    %v328 = vtanh.pop %v327
    %330 = vrot.lane.b32.xlu0 %v328, 64
    %v331 = vpop.permute.xlu0 %330
    %v333 = vmul.f32 %v312, %v331
    %v335 = vrot.slane %v333, 2
    %336 = vrot.lane.b32.xlu0 %v335, 32
    %v337 = vpop.permute.xlu0 %336
    %v338 = vsel %vm133, %v337, 0
    %340 = vmatpush.msra.mxu0 0.0
    %341 = vmatpush.msra.mxu0 0.0
    %342 = vmatpush.msra.mxu0 0.0
    %343 = vmatpush.msra.mxu0 0.0
    %344 = vmatpush.msra.mxu0 0.0
    %345 = vmatpush.msra.mxu0 0.0
    %346 = vmatpush.msra.mxu0 0.0
    %347 = vmatpush.msra.mxu0 0.0
    %348 = vmatpush.msra.mxu0 0.0
    %349 = vmatpush.msra.mxu0 0.0
    %350 = vmatpush.msra.mxu0 0.0
    %351 = vmatpush.msra.mxu0 0.0
    %352 = vmatpush.msra.mxu0 %v132
    %353 = vmatpush.msra.mxu0 %v131
    %354 = vmatpush.msra.mxu0 %v130
    %355 = vmatpush.msra.mxu0 %v129
    %356 = vmatmul.f32.gmra.mxu0 %v338
    %v357 = vpop.f32.mrf.mxu0
    %v358 = vadd.f32 0.0, %v357
    %359 = vdwg.mxu0
    %v361 = vrot.slane %v358, 5
    %v363 = vadd.f32 %v127, %v361
    %v364 = vxor.u32 %v363, 2147483648
    %v365 = vmul.f32 %v364, 1.442695
    %v366 = vpow.pop %v365
    %v367 = vadd.f32 %v366, 1.0
    %v368 = vrcp.pop %v367
    %v369 = vmul.f32 %v367, %v368
    %v370 = vsub.f32 1.0, %v369
    %v371 = vmul.f32 %v368, %v370
    %v372 = vadd.f32 %v368, %v371
    %vm373 = vweird.f32 %v367
    %vm374 = vweird.f32 %v368
    %vm375 = vmor %vm373, %vm374
    %v376 = vsel %vm375, %v368, %v372
    %v377 = vand.u32 2147483647, %v367
    %vm378 = vcmp.eq.f32.partialorder %v377, 8.507059e+37
    %v379 = vand.u32 %v367, 2147483648
    %v380 = vor.u32 1.1754944e-38, %v379
    %v381 = vsel %vm378, %v380, %v376
    %v382 = vmul.f32 1.0, %v381
    %v383 = vtanh.pop %v363
    %v385 = vrot.slane %v327, 7
    %v387 = vmul.f32 %v382, %v385
    %389 = vrot.lane.b32.xlu0 %v383, 64
    %v390 = vpop.permute.xlu0 %389
    %v392 = vmul.f32 %v382, %v390
    %394 = vrot.lane.b32.xlu0 %v392, 32
    %v395 = vpop.permute.xlu0 %394
    %v397 = vadd.f32 %v387, %v395
    %v398 = vtanh.pop %v397
    %400 = vrot.lane.b32.xlu0 %v398, 64
    %v401 = vpop.permute.xlu0 %400
    %v403 = vmul.f32 %v382, %v401
    %v405 = vrot.slane %v403, 3
    %406 = vrot.lane.b32.xlu0 %v405, 32
    %v407 = vpop.permute.xlu0 %406
    %v408 = vsel %vm133, %v407, 0
    %410 = vmatpush.msra.mxu0 0.0
    %411 = vmatpush.msra.mxu0 0.0
    %412 = vmatpush.msra.mxu0 0.0
    %413 = vmatpush.msra.mxu0 0.0
    %414 = vmatpush.msra.mxu0 0.0
    %415 = vmatpush.msra.mxu0 0.0
    %416 = vmatpush.msra.mxu0 0.0
    %417 = vmatpush.msra.mxu0 0.0
    %418 = vmatpush.msra.mxu0 0.0
    %419 = vmatpush.msra.mxu0 0.0
    %420 = vmatpush.msra.mxu0 0.0
    %421 = vmatpush.msra.mxu0 0.0
    %422 = vmatpush.msra.mxu0 %v132
    %423 = vmatpush.msra.mxu0 %v131
    %424 = vmatpush.msra.mxu0 %v130
    %425 = vmatpush.msra.mxu0 %v129
    %426 = vmatmul.f32.gmra.mxu0 %v408
    %v427 = vpop.f32.mrf.mxu0
    %v428 = vadd.f32 0.0, %v427
    %429 = vdwg.mxu0
    %v431 = vrot.slane %v428, 4
    %v433 = vadd.f32 %v127, %v431
    %v434 = vxor.u32 %v433, 2147483648
    %v435 = vmul.f32 %v434, 1.442695
    %v436 = vpow.pop %v435
    %v437 = vadd.f32 %v436, 1.0
    %v438 = vrcp.pop %v437
    %v439 = vmul.f32 %v437, %v438
    %v440 = vsub.f32 1.0, %v439
    %v441 = vmul.f32 %v438, %v440
    %v442 = vadd.f32 %v438, %v441
    %vm443 = vweird.f32 %v437
    %vm444 = vweird.f32 %v438
    %vm445 = vmor %vm443, %vm444
    %v446 = vsel %vm445, %v438, %v442
    %v447 = vand.u32 2147483647, %v437
    %vm448 = vcmp.eq.f32.partialorder %v447, 8.507059e+37
    %v449 = vand.u32 %v437, 2147483648
    %v450 = vor.u32 1.1754944e-38, %v449
    %v451 = vsel %vm448, %v450, %v446
    %v452 = vmul.f32 1.0, %v451
    %v453 = vtanh.pop %v433
    %v455 = vrot.slane %v397, 7
    %v457 = vmul.f32 %v452, %v455
    %459 = vrot.lane.b32.xlu0 %v453, 64
    %v460 = vpop.permute.xlu0 %459
    %v462 = vmul.f32 %v452, %v460
    %464 = vrot.lane.b32.xlu0 %v462, 32
    %v465 = vpop.permute.xlu0 %464
    %v467 = vadd.f32 %v457, %v465
    %v468 = vtanh.pop %v467
    %470 = vrot.lane.b32.xlu0 %v468, 64
    %v471 = vpop.permute.xlu0 %470
    %v473 = vmul.f32 %v452, %v471
    %v475 = vrot.slane %v473, 4
    %476 = vrot.lane.b32.xlu0 %v475, 32
    %v477 = vpop.permute.xlu0 %476
    %v478 = vsel %vm133, %v477, 0
    %480 = vmatpush.msra.mxu0 0.0
    %481 = vmatpush.msra.mxu0 0.0
    %482 = vmatpush.msra.mxu0 0.0
    %483 = vmatpush.msra.mxu0 0.0
    %484 = vmatpush.msra.mxu0 0.0
    %485 = vmatpush.msra.mxu0 0.0
    %486 = vmatpush.msra.mxu0 0.0
    %487 = vmatpush.msra.mxu0 0.0
    %488 = vmatpush.msra.mxu0 0.0
    %489 = vmatpush.msra.mxu0 0.0
    %490 = vmatpush.msra.mxu0 0.0
    %491 = vmatpush.msra.mxu0 0.0
    %492 = vmatpush.msra.mxu0 %v132
    %493 = vmatpush.msra.mxu0 %v131
    %494 = vmatpush.msra.mxu0 %v130
    %495 = vmatpush.msra.mxu0 %v129
    %496 = vmatmul.f32.gmra.mxu0 %v478
    %v497 = vpop.f32.mrf.mxu0
    %v498 = vadd.f32 0.0, %v497
    %499 = vdwg.mxu0
    %v501 = vrot.slane %v498, 3
    %v503 = vadd.f32 %v127, %v501
    %v504 = vxor.u32 %v503, 2147483648
    %v505 = vmul.f32 %v504, 1.442695
    %v506 = vpow.pop %v505
    %v507 = vadd.f32 %v506, 1.0
    %v508 = vrcp.pop %v507
    %v509 = vmul.f32 %v507, %v508
    %v510 = vsub.f32 1.0, %v509
    %v511 = vmul.f32 %v508, %v510
    %v512 = vadd.f32 %v508, %v511
    %vm513 = vweird.f32 %v507
    %vm514 = vweird.f32 %v508
    %vm515 = vmor %vm513, %vm514
    %v516 = vsel %vm515, %v508, %v512
    %v517 = vand.u32 2147483647, %v507
    %vm518 = vcmp.eq.f32.partialorder %v517, 8.507059e+37
    %v519 = vand.u32 %v507, 2147483648
    %v520 = vor.u32 1.1754944e-38, %v519
    %v521 = vsel %vm518, %v520, %v516
    %v522 = vmul.f32 1.0, %v521
    %v523 = vtanh.pop %v503
    %v525 = vrot.slane %v467, 7
    %v527 = vmul.f32 %v522, %v525
    %529 = vrot.lane.b32.xlu0 %v523, 64
    %v530 = vpop.permute.xlu0 %529
    %v532 = vmul.f32 %v522, %v530
    %534 = vrot.lane.b32.xlu0 %v532, 32
    %v535 = vpop.permute.xlu0 %534
    %v537 = vadd.f32 %v527, %v535
    %v538 = vtanh.pop %v537
    %540 = vrot.lane.b32.xlu0 %v538, 64
    %v541 = vpop.permute.xlu0 %540
    %v543 = vmul.f32 %v522, %v541
    %v545 = vrot.slane %v543, 5
    %546 = vrot.lane.b32.xlu0 %v545, 32
    %v547 = vpop.permute.xlu0 %546
    %v548 = vsel %vm133, %v547, 0
    %550 = vmatpush.msra.mxu0 0.0
    %551 = vmatpush.msra.mxu0 0.0
    %552 = vmatpush.msra.mxu0 0.0
    %553 = vmatpush.msra.mxu0 0.0
    %554 = vmatpush.msra.mxu0 0.0
    %555 = vmatpush.msra.mxu0 0.0
    %556 = vmatpush.msra.mxu0 0.0
    %557 = vmatpush.msra.mxu0 0.0
    %558 = vmatpush.msra.mxu0 0.0
    %559 = vmatpush.msra.mxu0 0.0
    %560 = vmatpush.msra.mxu0 0.0
    %561 = vmatpush.msra.mxu0 0.0
    %562 = vmatpush.msra.mxu0 %v132
    %563 = vmatpush.msra.mxu0 %v131
    %564 = vmatpush.msra.mxu0 %v130
    %565 = vmatpush.msra.mxu0 %v129
    %566 = vmatmul.f32.gmra.mxu0 %v548
    %v567 = vpop.f32.mrf.mxu0
    %v568 = vadd.f32 0.0, %v567
    %569 = vdwg.mxu0
    %v571 = vrot.slane %v568, 2
    %v573 = vadd.f32 %v127, %v571
    %v574 = vxor.u32 %v573, 2147483648
    %v575 = vmul.f32 %v574, 1.442695
    %v576 = vpow.pop %v575
    %v577 = vadd.f32 %v576, 1.0
    %v578 = vrcp.pop %v577
    %v579 = vmul.f32 %v577, %v578
    %v580 = vsub.f32 1.0, %v579
    %v581 = vmul.f32 %v578, %v580
    %v582 = vadd.f32 %v578, %v581
    %vm583 = vweird.f32 %v577
    %vm584 = vweird.f32 %v578
    %vm585 = vmor %vm583, %vm584
    %v586 = vsel %vm585, %v578, %v582
    %v587 = vand.u32 2147483647, %v577
    %vm588 = vcmp.eq.f32.partialorder %v587, 8.507059e+37
    %v589 = vand.u32 %v577, 2147483648
    %v590 = vor.u32 1.1754944e-38, %v589
    %v591 = vsel %vm588, %v590, %v586
    %v592 = vmul.f32 1.0, %v591
    %v593 = vtanh.pop %v573
    %v595 = vrot.slane %v537, 7
    %v597 = vmul.f32 %v592, %v595
    %599 = vrot.lane.b32.xlu0 %v593, 64
    %v600 = vpop.permute.xlu0 %599
    %v602 = vmul.f32 %v592, %v600
    %604 = vrot.lane.b32.xlu0 %v602, 32
    %v605 = vpop.permute.xlu0 %604
    %v607 = vadd.f32 %v597, %v605
    %v608 = vtanh.pop %v607
    %610 = vrot.lane.b32.xlu0 %v608, 64
    %v611 = vpop.permute.xlu0 %610
    %v613 = vmul.f32 %v592, %v611
    %v615 = vrot.slane %v613, 6
    %616 = vrot.lane.b32.xlu0 %v615, 32
    %v617 = vpop.permute.xlu0 %616
    %v618 = vsel %vm133, %v617, 0
    %620 = vmatpush.msra.mxu0 0.0
    %621 = vmatpush.msra.mxu0 0.0
    %622 = vmatpush.msra.mxu0 0.0
    %623 = vmatpush.msra.mxu0 0.0
    %624 = vmatpush.msra.mxu0 0.0
    %625 = vmatpush.msra.mxu0 0.0
    %626 = vmatpush.msra.mxu0 0.0
    %627 = vmatpush.msra.mxu0 0.0
    %628 = vmatpush.msra.mxu0 0.0
    %629 = vmatpush.msra.mxu0 0.0
    %630 = vmatpush.msra.mxu0 0.0
    %631 = vmatpush.msra.mxu0 0.0
    %632 = vmatpush.msra.mxu0 %v132
    %633 = vmatpush.msra.mxu0 %v131
    %634 = vmatpush.msra.mxu0 %v130
    %635 = vmatpush.msra.mxu0 %v129
    %636 = vmatmul.f32.gmra.mxu0 %v618
    %v637 = vpop.f32.mrf.mxu0
    %v638 = vadd.f32 0.0, %v637
    %639 = vdwg.mxu0
    %v641 = vrot.slane %v638, 1
    %v643 = vadd.f32 %v127, %v641
    %v644 = vxor.u32 %v643, 2147483648
    %v645 = vmul.f32 %v644, 1.442695
    %v646 = vpow.pop %v645
    %v647 = vadd.f32 %v646, 1.0
    %v648 = vrcp.pop %v647
    %v649 = vmul.f32 %v647, %v648
    %v650 = vsub.f32 1.0, %v649
    %v651 = vmul.f32 %v648, %v650
    %v652 = vadd.f32 %v648, %v651
    %vm653 = vweird.f32 %v647
    %vm654 = vweird.f32 %v648
    %vm655 = vmor %vm653, %vm654
    %v656 = vsel %vm655, %v648, %v652
    %v657 = vand.u32 2147483647, %v647
    %vm658 = vcmp.eq.f32.partialorder %v657, 8.507059e+37
    %v659 = vand.u32 %v647, 2147483648
    %v660 = vor.u32 1.1754944e-38, %v659
    %v661 = vsel %vm658, %v660, %v656
    %v662 = vmul.f32 1.0, %v661
    %v663 = vtanh.pop %v643
    %v665 = vrot.slane %v607, 7
    %v667 = vmul.f32 %v662, %v665
    %669 = vrot.lane.b32.xlu0 %v663, 64
    %v670 = vpop.permute.xlu0 %669
    %v672 = vmul.f32 %v662, %v670
    %674 = vrot.lane.b32.xlu0 %v672, 32
    %v675 = vpop.permute.xlu0 %674
    %v677 = vadd.f32 %v667, %v675
    %v678 = vtanh.pop %v677
    %680 = vrot.lane.b32.xlu0 %v678, 64
    %v681 = vpop.permute.xlu0 %680
    %v683 = vmul.f32 %v662, %v681
    %v684 = vsel %vm85, %v194, %v263
    %v685 = vsel %vm87, %v684, %v333
    %v686 = vsel %vm89, %v685, %v403
    %v687 = vsel %vm91, %v686, %v473
    %v688 = vsel %vm93, %v687, %v543
    %v689 = vsel %vm95, %v688, %v613
    %v690 = vsel %vm97, %v689, %v683
    %v691 = vld [vmem:[%s5] sm:$0xff]
    %v692 = vld [vmem:[%s5 + $0x8] sm:$0xff]
    %v693 = vld [vmem:[%s5 + $0x10] sm:$0xff]
    %v694 = vld [vmem:[%s5 + $0x18] sm:$0xff]
    %v695 = vld [vmem:[%s6] sm:$0x1]
    %v697 = vperm.slane %v695, 0
    %700 = vrot.lane.b32.xlu0 %v690, 32
    %v701 = vpop.permute.xlu0 %700
    %v702 = vsel %vm133, %v701, 0
    %704 = vmatpush.msra.mxu0 0.0
    %705 = vmatpush.msra.mxu0 0.0
    %706 = vmatpush.msra.mxu0 0.0
    %707 = vmatpush.msra.mxu0 0.0
    %708 = vmatpush.msra.mxu0 0.0
    %709 = vmatpush.msra.mxu0 0.0
    %710 = vmatpush.msra.mxu0 0.0
    %711 = vmatpush.msra.mxu0 0.0
    %712 = vmatpush.msra.mxu0 0.0
    %713 = vmatpush.msra.mxu0 0.0
    %714 = vmatpush.msra.mxu0 0.0
    %715 = vmatpush.msra.mxu0 0.0
    %716 = vmatpush.msra.mxu0 %v694
    %717 = vmatpush.msra.mxu0 %v693
    %718 = vmatpush.msra.mxu0 %v692
    %719 = vmatpush.msra.mxu0 %v691
    %720 = vmatmul.f32.gmra.mxu0 %v702
    %v721 = vpop.f32.mrf.mxu0
    %v722 = vadd.f32 %v697, %v721
    %723 = vdwg.mxu0
    %vm724 = vcmask 64512
    %v725 = vsel %vm724, %v722, -inf
    %726 = vmax.xlane.f32.xlu0 %v725
    %v727 = vpop.xlane.xlu0 %726
    %v728 = vsub.f32 %v722, %v727
    %v729 = vmul.f32 %v728, 1.442695
    %v730 = vpow.pop %v729
    %v731 = vsel %vm724, %v730, 0.0
    %732 = vadd.xlane.f32.xlu0 %v731
    %v733 = vpop.xlane.xlu0 %732
    %v734 = vlog2.pop %v733
    %v735 = vmul.f32 %v734, 0.6931472
    %v736 = vadd.f32 %v735, %v727
    %v737 = vsub.f32 %v722, %v736
    %738 = vst.msk [vmem:[#allocation5] sm:$0xff] %vm724, %v737
    // Predicated region
    $region34: #{lstm_tagger_forward.1} parent=1 // pred_check
      _
    $region35: #{lstm_tagger_forward.1} parent=1 // pred_check_branch
      %740 = sbr.rel (0) target = $region37
    $region36: #{lstm_tagger_forward.1} parent=1 // pred_region
      %742 = vsyncadd [#allocation3], 0
      %s744 = sshll.u32 [#allocation5], 4
      %s745 = int_to_ptr.vmem [resolvable:$true] %s744
      %s746 = sshll.u32 %s7, 4
      %s747 = int_to_ptr.hbm [resolvable:$true] %s746
      %749 = dma.vmem_to_hbm [thread:$0]  %s745, 128, %s747, [#allocation3]
    $region37: #{lstm_tagger_forward.1} parent=1 // pred_fallthru
      _
    // Predicated region
    $region38: #{lstm_tagger_forward.1} parent=1 // pred_check
      _
    $region39: #{lstm_tagger_forward.1} parent=1 // pred_check_branch
      %751 = sbr.rel (0) target = $region41
    $region40: #{lstm_tagger_forward.1} parent=1 // pred_region
      %753 = dma.done [#allocation3], 128
    $region41: #{lstm_tagger_forward.1} parent=1 // pred_fallthru
      _
    %754 = vsyncpa [#allocation3], 1
    %755 = vsyncpa [#allocation4], 1

</llo_original>
